<compile_context>
chip_gen: v7x
topology: tpu7x:2x2x1
jax: 0.10.0
libtpu: 0.0.40
codegen_flags: <defaults>
</compile_context>

<pallas_src>
import jax
import jax.numpy as jnp
from jax.experimental import pallas as pl
from jax.experimental.pallas import tpu as pltpu


def _round_up(x: int, m: int) -> int:
    return ((x + m - 1) // m) * m


def _pick_tile(dim: int, max_tile: int, align: int) -> int:
    """Largest tile of the form align * 2^k <= max_tile whose padding waste
    stays within ~12.5% of the minimally aligned size."""
    base = _round_up(dim, align)
    best = align
    t = align
    while t <= max_tile:
        if _round_up(dim, t) * 8 <= base * 9:
            best = t
        t *= 2
    return best


def _vmem_budget_bytes() -> int:
    """Per-generation VMEM budget: ~96 MiB on 128-MiB parts (v5e/v6e),
    ~56 MiB on 64-MiB parts (v7x). Conservative fallback if query fails."""
    cap = None
    try:
        info = pltpu.get_tpu_info()
        for name in ("vmem_capacity_bytes", "vmem_size_bytes", "vmem_bytes"):
            cap = getattr(info, name, None)
            if cap:
                break
    except Exception:
        cap = None
    if cap and cap > (64 << 20):
        return 96 << 20
    return 56 << 20


# ---------------------------------------------------------------------------
# Kernels
# ---------------------------------------------------------------------------
def _linear_resident_kernel(x_ref, w_ref, b_ref, o_ref):
    """Whole weight resident in VMEM; one output row-block per grid step.

    x_ref: (tm, Kp)   activation row block
    w_ref: (Kp, Np)   full weight in [K, N] layout (DMA'd once)
    b_ref: (1,  Np)   bias (f32)
    o_ref: (tm, Np)   output row block
    """
    acc = jnp.dot(x_ref[...], w_ref[...], preferred_element_type=jnp.float32)
    o_ref[...] = (acc + b_ref[...].astype(jnp.float32)).astype(o_ref.dtype)


def _linear_tiled_kernel(x_ref, w_ref, b_ref, o_ref, acc_ref):
    """General 3-D (i, j, k) grid step of y = x @ W.T + b (W stored as [K, N]).

    x_ref: (tm, tk), w_ref: (tk, tn), b_ref: (1, tn), o_ref: (tm, tn),
    acc_ref: (tm, tn) f32 accumulator living across the K axis.
    """
    k = pl.program_id(2)
    partial = jnp.dot(x_ref[...], w_ref[...], preferred_element_type=jnp.float32)

    @pl.when(k == 0)
    def _first():
        acc_ref[...] = partial          # no zero-init + += round trip

    @pl.when(k > 0)
    def _accum():
        acc_ref[...] += partial

    @pl.when(k == pl.num_programs(2) - 1)
    def _finalize():
        o_ref[...] = (acc_ref[...] + b_ref[...].astype(jnp.float32)).astype(o_ref.dtype)


# ---------------------------------------------------------------------------
# Parameter prep (one-time, hoisted out of the per-call path)
# ---------------------------------------------------------------------------
def prepare_perceptron_params(weight, bias, *, compute_dtype=None,
                              max_tn=512, max_tk=1024):
    """weight: [out_features, in_features] (PyTorch layout), bias: [out_features].

    Returns a dict holding the weight cast (optional), transposed to [K, N]
    and zero-padded to tile multiples, plus a padded f32 bias row.
    """
    N, K = weight.shape
    assert bias.shape == (N,)
    if compute_dtype is not None:
        weight = weight.astype(compute_dtype)

    tn = _pick_tile(N, max_tn, 128)
    tk = _pick_tile(K, max_tk, 128)
    Np = _round_up(N, tn)
    Kp = _round_up(K, tk)

    w_t = weight.T                                    # [K, N]: MXU-friendly, no XLU transpose
    if (Kp, Np) != (K, N):
        w_t = jnp.pad(w_t, ((0, Kp - K), (0, Np - N)))
    b = bias.astype(jnp.float32)
    if Np != N:
        b = jnp.pad(b, (0, Np - N))
    b = b.reshape(1, Np)

    return {"w_t": w_t, "b": b, "in_features": K, "out_features": N,
            "tn": tn, "tk": tk, "compute_dtype": compute_dtype}


# ---------------------------------------------------------------------------
# Forward
# ---------------------------------------------------------------------------
def perceptron_forward(x, params, *, max_tm=512, force_tiled=False):
    """x: [B, in_features] -> [B, out_features] in x.dtype (== nn.Linear)."""
    B, K = x.shape
    assert K == params["in_features"], "weight in_features must match x"
    N = params["out_features"]
    w_t, b = params["w_t"], params["b"]
    Kp, Np = w_t.shape
    tn, tk = params["tn"], params["tk"]

    out_dtype = x.dtype
    cd = params["compute_dtype"]
    if cd is not None:
        x = x.astype(cd)
    itemsize = jnp.dtype(x.dtype).itemsize
    out_itemsize = jnp.dtype(out_dtype).itemsize
    sublane = 16 if itemsize == 2 else 8            # packed bf16 rows

    budget = _vmem_budget_bytes()
    tm = _pick_tile(B, max_tm, sublane)

    # ---------- Path A: weight resident in VMEM, 1-D grid over M ----------
    resident_est = (2 * tm * Kp * itemsize          # x (double-buffered)
                    + 2 * Kp * Np * itemsize        # W (fetched once; 2x for safety)
                    + 2 * Np * 4                    # bias
                    + 2 * tm * Np * out_itemsize    # output
                    + tm * Np * 4)                  # f32 intermediate headroom
    if (not force_tiled) and resident_est <= budget // 2:
        Mp = _round_up(B, tm)
        xp = x if (Mp, Kp) == (B, K) else jnp.pad(x, ((0, Mp - B), (0, Kp - K)))
        out_padded = pl.pallas_call(
            _linear_resident_kernel,
            out_shape=jax.ShapeDtypeStruct((Mp, Np), out_dtype),
            grid_spec=pltpu.PrefetchScalarGridSpec(
                num_scalar_prefetch=0,
                grid=(Mp // tm,),
                in_specs=[
                    pl.BlockSpec((tm, Kp), lambda i: (i, 0)),   # x row block
                    pl.BlockSpec((Kp, Np), lambda i: (0, 0)),   # full W, DMA'd once
                    pl.BlockSpec((1, Np), lambda i: (0, 0)),    # bias
                ],
                out_specs=pl.BlockSpec((tm, Np), lambda i: (i, 0)),
            ),
            compiler_params=pltpu.CompilerParams(
                dimension_semantics=("parallel",),
                vmem_limit_bytes=budget,
            ),
        )(xp, w_t, b)
        return out_padded[:B, :N]

    # ---------- Path B: general 3-D (M, N, K) grid with f32 accumulator ----
    def est(tm_, tn_, tk_):
        return (2 * (tm_ * tk_ + tk_ * tn_) * itemsize
                + 2 * tn_ * 4
                + 2 * tm_ * tn_ * out_itemsize
                + tm_ * tn_ * 4)

    # Shrink tiles only if the double-buffered working set exceeds the budget.
    # Halving keeps divisibility of the prep-time padded dims (power-of-two tiles).
    while est(tm, tn, tk) > (budget * 3) // 4:
        if tk >= max(tm, tn) and tk > 128:
            tk //= 2
        elif tn >= tm and tn > 128:
            tn //= 2
        elif tm > sublane:
            tm = max(sublane, tm // 2)
        else:
            break

    Mp = _round_up(B, tm)
    xp = x if (Mp, Kp) == (B, K) else jnp.pad(x, ((0, Mp - B), (0, Kp - K)))
    grid = (Mp // tm, Np // tn, Kp // tk)

    out_padded = pl.pallas_call(
        _linear_tiled_kernel,
        out_shape=jax.ShapeDtypeStruct((Mp, Np), out_dtype),
        grid_spec=pltpu.PrefetchScalarGridSpec(
            num_scalar_prefetch=0,
            grid=grid,
            in_specs=[
                pl.BlockSpec((tm, tk), lambda i, j, k: (i, k)),   # x tile
                pl.BlockSpec((tk, tn), lambda i, j, k: (k, j)),   # W tile in [K, N]
                pl.BlockSpec((1, tn), lambda i, j, k: (0, j)),    # bias tile
            ],
            out_specs=pl.BlockSpec((tm, tn), lambda i, j, k: (i, j)),
            scratch_shapes=[pltpu.VMEM((tm, tn), jnp.float32)],
        ),
        compiler_params=pltpu.CompilerParams(
            dimension_semantics=("parallel", "parallel", "arbitrary"),
            vmem_limit_bytes=budget,
        ),
    )(xp, w_t, b)
    return out_padded[:B, :N]


if __name__ == "__main__":
    key = jax.random.PRNGKey(0)

    # --- Case 1: small Perceptron (f32), resident-weight fast path ---------
    in_features, out_features, batch = 32, 16, 8
    kx, kw, kb = jax.random.split(key, 3)
    bound = 1.0 / jnp.sqrt(jnp.float32(in_features))
    weight = jax.random.uniform(kw, (out_features, in_features),
                                minval=-bound, maxval=bound, dtype=jnp.float32)
    bias = jax.random.uniform(kb, (out_features,),
                              minval=-bound, maxval=bound, dtype=jnp.float32)
    x = jax.random.normal(kx, (batch, in_features), dtype=jnp.float32)

    params = prepare_perceptron_params(weight, bias)
    out = jax.block_until_ready(perceptron_forward(x, params))
    ref = x @ weight.T + bias
    assert out.shape == (batch, out_features)
    assert jnp.allclose(out, ref, atol=2e-5, rtol=2e-5), "resident path mismatch"

    # --- Case 2: exercise the general 3-D tiled path (grid_K > 1) ----------
    in2, out2, b2 = 384, 256, 48
    k2x, k2w, k2b = jax.random.split(jax.random.PRNGKey(0), 3)
    bound2 = 1.0 / jnp.sqrt(jnp.float32(in2))
    w2 = jax.random.uniform(k2w, (out2, in2), minval=-bound2, maxval=bound2,
                            dtype=jnp.float32)
    bias2 = jax.random.uniform(k2b, (out2,), minval=-bound2, maxval=bound2,
                               dtype=jnp.float32)
    x2 = jax.random.normal(k2x, (b2, in2), dtype=jnp.float32)
    params2 = prepare_perceptron_params(w2, bias2, max_tn=128, max_tk=128)
    out2_arr = jax.block_until_ready(
        perceptron_forward(x2, params2, force_tiled=True))
    ref2 = x2 @ w2.T + bias2
    assert jnp.allclose(out2_arr, ref2, atol=1e-4, rtol=1e-4), "tiled path mismatch"

    # --- Case 3: bf16 compute / f32 accumulate (recommended on v6e/v7x) ----
    params_bf16 = prepare_perceptron_params(weight, bias,
                                            compute_dtype=jnp.bfloat16)
    out_bf16 = jax.block_until_ready(perceptron_forward(x, params_bf16))
    assert out_bf16.dtype == x.dtype
    assert jnp.allclose(out_bf16, ref, atol=5e-2, rtol=5e-2), "bf16 path mismatch"

    print("KERNEL_OK")
</pallas_src>

<mosaic_0001>
module attributes {stable_mosaic.version = 11 : i64} {
  func.func @_linear_resident_kernel(%arg0: i32, %arg1: memref<8x128xf32, #tpu.memory_space<vmem>>, %arg2: memref<128x128xf32, #tpu.memory_space<vmem>>, %arg3: memref<1x128xf32, #tpu.memory_space<vmem>>, %arg4: memref<8x128xf32, #tpu.memory_space<vmem>>) attributes {dimension_semantics = [#tpu.dimension_semantics<parallel>], iteration_bounds = array<i64: 1>, scalar_prefetch = 0 : i64, scratch_operands = 0 : i64, tpu.core_type = #tpu.core_type<tc>, window_params = [{transform_indices = @transform_0, window_bounds = array<i64: 8, 128>}, {pipeline_mode = #tpu.pipeline_mode<synchronous>, transform_indices = @transform_1, window_bounds = array<i64: 128, 128>}, {pipeline_mode = #tpu.pipeline_mode<synchronous>, transform_indices = @transform_2, window_bounds = array<i64: 1, 128>}, {transform_indices = @transform_3, window_bounds = array<i64: 8, 128>}]} {
    %c0 = arith.constant 0 : index
    %c0_0 = arith.constant 0 : index
    %0 = vector.load %arg1[%c0, %c0_0] : memref<8x128xf32, #tpu.memory_space<vmem>>, vector<8x128xf32>
    %c0_1 = arith.constant 0 : index
    %c0_2 = arith.constant 0 : index
    %1 = vector.load %arg2[%c0_1, %c0_2] : memref<128x128xf32, #tpu.memory_space<vmem>>, vector<128x128xf32>
    %cst = arith.constant dense<0.000000e+00> : vector<8x128xf32>
    %2 = tpu.matmul %0, %1, %cst {dimension_numbers = #tpu.dot_dimension_numbers<[1], [0], [0], [1], [0, 0, 1, 1], [], []>} : vector<8x128xf32>, vector<128x128xf32>, vector<8x128xf32> -> vector<8x128xf32>
    %c0_3 = arith.constant 0 : index
    %c0_4 = arith.constant 0 : index
    %3 = vector.load %arg3[%c0_3, %c0_4] : memref<1x128xf32, #tpu.memory_space<vmem>>, vector<1x128xf32>
    %4 = vector.broadcast %3 : vector<1x128xf32> to vector<8x128xf32>
    %5 = arith.addf %2, %4 : vector<8x128xf32>
    %c0_5 = arith.constant 0 : index
    %c0_6 = arith.constant 0 : index
    %6 = vector.load %arg4[%c0_5, %c0_6] : memref<8x128xf32, #tpu.memory_space<vmem>>, vector<8x128xf32>
    tpu.vector_store %arg4[%c0_5, %c0_6], %5 {strides = array<i32>} : memref<8x128xf32, #tpu.memory_space<vmem>>, vector<8x128xf32>,
    return
  }
  func.func @transform_0(%arg0: i32) -> (i32, i32) {
    %c0_i32 = arith.constant 0 : i32
    %c0_i32_0 = arith.constant 0 : i32
    return %arg0, %c0_i32 : i32, i32
  }
  func.func @transform_1(%arg0: i32) -> (i32, i32) {
    %c0_i32 = arith.constant 0 : i32
    %c0_i32_0 = arith.constant 0 : i32
    %c0_i32_1 = arith.constant 0 : i32
    return %c0_i32, %c0_i32_0 : i32, i32
  }
  func.func @transform_2(%arg0: i32) -> (i32, i32) {
    %c0_i32 = arith.constant 0 : i32
    %c0_i32_0 = arith.constant 0 : i32
    %c0_i32_1 = arith.constant 0 : i32
    return %c0_i32, %c0_i32_0 : i32, i32
  }
  func.func @transform_3(%arg0: i32) -> (i32, i32) {
    %c0_i32 = arith.constant 0 : i32
    %c0_i32_0 = arith.constant 0 : i32
    return %arg0, %c0_i32 : i32, i32
  }
}

</mosaic_0001>

<llo_original>
// kernel: tpu_custom_call.1
$region0: #{tpu_custom_call.1}
  #allocation0 [shape = 'u32[]', space=smem, size = 0x4, offset = 0x4, fixed_abs, tag = 'smem constant byte address 0x4 - core index']
  #allocation1 [shape = 'u32[144,128]{1,0:T(1,128)}', space=vmem, size = 0x12000, scoped, tag = 'internal scratch']
  %s0 = inlined_call_operand.hbm [shape: f32[8,128], index: 0, kind: input, shape index: {}]
  %s1 = inlined_call_operand.hbm [shape: f32[128,128], index: 1, kind: input, shape index: {}]
  %s2 = inlined_call_operand.vmem [shape: f32[1,128], index: 2, kind: input, shape index: {}]
  %s3 = inlined_call_operand.hbm [shape: f32[8,128], index: 3, kind: output, shape index: {}]
  %s4 = sld [smem:[#allocation0]]
  $region30: #{tpu_custom_call.1} parent=0
    _
  %s6 = ssub.s32 1, %s4
  %s7 = scalar_select 0, %s6, %s4
  $region1: #{tpu_custom_call.1} parent=0
    #allocation2 [shape = 'u8[4096]{0}', space=vmem, size = 0x1000, scoped, tag = 'input window, operand 0, single buffered']
    #allocation3 [shape = 's32[1]{0}', space=sflag, size = 0x4, scoped, tag = 'scoped memory for tpu_custom_call.1']
    #allocation4 [shape = 's32[1]{0}', space=sflag, size = 0x4, scoped, tag = 'scoped memory for tpu_custom_call.1']
    #allocation5 [shape = 'u8[65536]{0}', space=vmem, size = 0x10000, scoped, tag = 'input window, operand 1, single buffered']
    #allocation6 [shape = 's32[1]{0}', space=sflag, size = 0x4, scoped, tag = 'scoped memory for tpu_custom_call.1']
    #allocation7 [shape = 'u8[4096]{0}', space=vmem, size = 0x1000, scoped, tag = 'output window, operand 0, single buffered']
    %8 = vsyncpa [#allocation3], 0
    %9 = vsyncpa [#allocation6], 0
    %10 = vsyncpa [#allocation4], 0
    // Predicated region
    $region2: #{tpu_custom_call.1} parent=1 // pred_check
      _
    $region3: #{tpu_custom_call.1} parent=1 // pred_check_branch
      %12 = sbr.rel (0) target = $region5
    $region4: #{tpu_custom_call.1} parent=1 // pred_region
      %s14 = ssub.s32 128, 128
      %15 = vsyncadd [#allocation3], %s14
      %s17 = sshll.u32 [#allocation2], 4
      %s18 = int_to_ptr.vmem [resolvable:$true] %s17
      %20 = dma.hbm_to_vmem [thread:$0]  %s0, 128, %s18, [#allocation3]
    $region5: #{tpu_custom_call.1} parent=1 // pred_fallthru
      _
    // Predicated region
    $region6: #{tpu_custom_call.1} parent=1 // pred_check
      _
    $region7: #{tpu_custom_call.1} parent=1 // pred_check_branch
      %22 = sbr.rel (0) target = $region9
    $region8: #{tpu_custom_call.1} parent=1 // pred_region
      %s24 = ssub.s32 2048, 2048
      %25 = vsyncadd [#allocation6], %s24
      %s26 = sshll.u32 [#allocation5], 4
      %s27 = int_to_ptr.vmem [resolvable:$true] %s26
      %32 = dma.hbm_to_vmem [thread:$0]  %s1, 2048, %s27, [#allocation6], 128, 128, 8
    $region9: #{tpu_custom_call.1} parent=1 // pred_fallthru
      _
    // Predicated region
    $region10: #{tpu_custom_call.1} parent=1 // pred_check
      _
    $region11: #{tpu_custom_call.1} parent=1 // pred_check_branch
      %34 = sbr.rel (0) target = $region13
    $region12: #{tpu_custom_call.1} parent=1 // pred_region
      _
    $region13: #{tpu_custom_call.1} parent=1 // pred_fallthru
      _
    // Predicated region
    $region14: #{tpu_custom_call.1} parent=1 // pred_check
      _
    $region15: #{tpu_custom_call.1} parent=1 // pred_check_branch
      %36 = sbr.rel (0) target = $region17
    $region16: #{tpu_custom_call.1} parent=1 // pred_region
      %37 = dma.done [#allocation3], 128
    $region17: #{tpu_custom_call.1} parent=1 // pred_fallthru
      _
    // Predicated region
    $region18: #{tpu_custom_call.1} parent=1 // pred_check
      _
    $region19: #{tpu_custom_call.1} parent=1 // pred_check_branch
      %39 = sbr.rel (0) target = $region21
    $region20: #{tpu_custom_call.1} parent=1 // pred_region
      %40 = dma.done [#allocation6], 2048
    $region21: #{tpu_custom_call.1} parent=1 // pred_fallthru
      _
    %v41 = vld [vmem:[#allocation2] sm:$0xff]
    %v42 = vld [vmem:[#allocation5] sm:$0xff]
    %v43 = vld [vmem:[#allocation5 + $0x8] sm:$0xff]
    %v44 = vld [vmem:[#allocation5 + $0x10] sm:$0xff]
    %v45 = vld [vmem:[#allocation5 + $0x18] sm:$0xff]
    %v46 = vld [vmem:[#allocation5 + $0x20] sm:$0xff]
    %v47 = vld [vmem:[#allocation5 + $0x28] sm:$0xff]
    %v48 = vld [vmem:[#allocation5 + $0x30] sm:$0xff]
    %v49 = vld [vmem:[#allocation5 + $0x38] sm:$0xff]
    %v50 = vld [vmem:[#allocation5 + $0x40] sm:$0xff]
    %v51 = vld [vmem:[#allocation5 + $0x48] sm:$0xff]
    %v52 = vld [vmem:[#allocation5 + $0x50] sm:$0xff]
    %v53 = vld [vmem:[#allocation5 + $0x58] sm:$0xff]
    %v54 = vld [vmem:[#allocation5 + $0x60] sm:$0xff]
    %v55 = vld [vmem:[#allocation5 + $0x68] sm:$0xff]
    %v56 = vld [vmem:[#allocation5 + $0x70] sm:$0xff]
    %v57 = vld [vmem:[#allocation5 + $0x78] sm:$0xff]
    %v58 = vld [vmem:[%s2] sm:$0x1]
    %v60 = vlaneseq
    %v61 = vshrl.u32 %v60, 7
    %v62 = vsub.s32 0, %v61
    %v63 = vrot.slane %v58, %v62
    %65 = vmatprep.subr.mxu0 0.0
    %66 = vmatpush1.msra.mxu0 %v42
    %67 = vmatprep.subr.mxu0 0.0
    %68 = vmatpush1.msra.mxu0 %v43
    %69 = vmatprep.subr.mxu0 0.0
    %70 = vmatpush1.msra.mxu0 %v44
    %71 = vmatprep.subr.mxu0 0.0
    %72 = vmatpush1.msra.mxu0 %v45
    %73 = vmatprep.subr.mxu0 0.0
    %74 = vmatpush1.msra.mxu0 %v46
    %75 = vmatprep.subr.mxu0 0.0
    %76 = vmatpush1.msra.mxu0 %v47
    %77 = vmatprep.subr.mxu0 0.0
    %78 = vmatpush1.msra.mxu0 %v48
    %79 = vmatprep.subr.mxu0 0.0
    %80 = vmatpush1.msra.mxu0 %v49
    %81 = vmatprep.subr.mxu0 0.0
    %82 = vmatpush1.msra.mxu0 %v50
    %83 = vmatprep.subr.mxu0 0.0
    %84 = vmatpush1.msra.mxu0 %v51
    %85 = vmatprep.subr.mxu0 0.0
    %86 = vmatpush1.msra.mxu0 %v52
    %87 = vmatprep.subr.mxu0 0.0
    %88 = vmatpush1.msra.mxu0 %v53
    %89 = vmatprep.subr.mxu0 0.0
    %90 = vmatpush1.msra.mxu0 %v54
    %91 = vmatprep.subr.mxu0 0.0
    %92 = vmatpush1.msra.mxu0 %v55
    %93 = vmatprep.subr.mxu0 0.0
    %94 = vmatpush1.msra.mxu0 %v56
    %95 = vmatprep.subr.mxu0 0.0
    %96 = vmatpush1.msra.mxu0 %v57
    %97 = vmatprep.subr.mxu0 0.0
    %98 = vmatpush1.msra.mxu0 0.0
    %99 = vmatprep.subr.mxu0 0.0
    %100 = vmatpush1.msra.mxu0 0.0
    %101 = vmatprep.subr.mxu0 0.0
    %102 = vmatpush1.msra.mxu0 0.0
    %103 = vmatprep.subr.mxu0 0.0
    %104 = vmatpush1.msra.mxu0 0.0
    %105 = vmatprep.subr.mxu0 0.0
    %106 = vmatpush1.msra.mxu0 0.0
    %107 = vmatprep.subr.mxu0 0.0
    %108 = vmatpush1.msra.mxu0 0.0
    %109 = vmatprep.subr.mxu0 0.0
    %110 = vmatpush1.msra.mxu0 0.0
    %111 = vmatprep.subr.mxu0 0.0
    %112 = vmatpush1.msra.mxu0 0.0
    %113 = vmatprep.subr.mxu0 0.0
    %114 = vmatpush1.msra.mxu0 0.0
    %115 = vmatprep.subr.mxu0 0.0
    %116 = vmatpush1.msra.mxu0 0.0
    %117 = vmatprep.subr.mxu0 0.0
    %118 = vmatpush1.msra.mxu0 0.0
    %119 = vmatprep.subr.mxu0 0.0
    %120 = vmatpush1.msra.mxu0 0.0
    %121 = vmatprep.subr.mxu0 0.0
    %122 = vmatpush1.msra.mxu0 0.0
    %123 = vmatprep.subr.mxu0 0.0
    %124 = vmatpush1.msra.mxu0 0.0
    %125 = vmatprep.subr.mxu0 0.0
    %126 = vmatpush1.msra.mxu0 0.0
    %127 = vmatprep.subr.mxu0 0.0
    %128 = vmatpush1.msra.mxu0 0.0
    %129 = vmatprep.mubr.f32.mxu0 0.0
    %130 = vmatmul.mubr.f32.gmra.mrb[0].mxu0 %v41
    %v131 = vpop.f32.mrb[0].mxu0
    %v132 = vadd.f32 %v63, %v131
    %v133 = vpop.f32.mrb[0].mxu0
    %134 = vdwg.mxu0
    %135 = vst [vmem:[#allocation7] sm:$0xff] %v132
    // Predicated region
    $region22: #{tpu_custom_call.1} parent=1 // pred_check
      _
    $region23: #{tpu_custom_call.1} parent=1 // pred_check_branch
      %137 = sbr.rel (0) target = $region25
    $region24: #{tpu_custom_call.1} parent=1 // pred_region
      %s139 = ssub.s32 128, 128
      %140 = vsyncadd [#allocation4], %s139
      %s142 = sshll.u32 [#allocation7], 4
      %s143 = int_to_ptr.vmem [resolvable:$true] %s142
      %145 = dma.vmem_to_hbm [thread:$0]  %s143, 128, %s3, [#allocation4]
    $region25: #{tpu_custom_call.1} parent=1 // pred_fallthru
      _
    // Predicated region
    $region26: #{tpu_custom_call.1} parent=1 // pred_check
      _
    $region27: #{tpu_custom_call.1} parent=1 // pred_check_branch
      %147 = sbr.rel (0) target = $region29
    $region28: #{tpu_custom_call.1} parent=1 // pred_region
      %148 = dma.done [#allocation4], 128
    $region29: #{tpu_custom_call.1} parent=1 // pred_fallthru
      _
    %149 = vsyncpa [#allocation3], 1
    %150 = vsyncpa [#allocation6], 1
    %151 = vsyncpa [#allocation4], 1

</llo_original>
